<compile_context>
chip_gen: v7x
topology: tpu7x:2x2x1
jax: 0.10.0
libtpu: 0.0.40
codegen_flags: <defaults>
</compile_context>

<pallas_src>
import math
import numpy as np
import jax
import jax.numpy as jnp
from jax.experimental import pallas as pl
from jax.experimental.pallas import tpu as pltpu

FEATURE_CHANNELS = 16   # length of each frame's feature vector (Conv1d width)
CHANNELS = 32           # discriminator channels
FRAMES = 8
BATCH = 2
LEAKY = 0.2

LANE = 128              # vreg lane width
SINGLE_STEP_MAX = 1024  # whole batch in one grid step up to here
MAX_BLOCK_B = 2048      # lane-tile cap for large batches (amortizes per-step cost)


def _round_up(v, m):
    return ((v + m - 1) // m) * m


# ---------------------------------------------------------------------------
# Module structure (mirrors DownsamplingStack / _build_layer in PyTorch code).
# ---------------------------------------------------------------------------
def build_stack_configs(feature_channels, channels):
    cfgs = []
    curr = feature_channels
    first = True
    while curr > 1:
        k = 7 if curr > 8 else 3
        p = k // 2
        cin = 1 if first else channels
        lout = (curr + 2 * p - k) // 2 + 1  # stride 2 -> curr // 2
        cfgs.append(dict(cin=cin, cout=channels, k=k, pad=p, stride=2,
                         lin=curr, lout=lout))
        curr = lout
        first = False
    return cfgs


def xavier_normal(key, shape, gain):
    cout, cin, k = shape
    fan_in, fan_out = cin * k, cout * k
    std = gain * math.sqrt(2.0 / (fan_in + fan_out))
    return std * jax.random.normal(key, shape, dtype=jnp.float32)


def conv_weight_to_matrix_T(w, lin, lout, stride, pad, k_pad, m_pad,
                            dtype=jnp.bfloat16):
    """Exact Conv1d(stride, pad, bias=False) as a dense matrix M_T of shape
    (m_pad >= Cout*Lout, k_pad >= Cin*Lin) acting on batch-in-lanes columns:
    h_out[:, b] = M_T @ h_in[:, b].  Padding rows/cols are zero (inert).
    Each entry is a single copied weight tap, so bf16(matrix) == matrix of
    bf16(weights)."""
    w = np.asarray(w, np.float32)
    cout, cin, k = w.shape
    m = np.zeros((m_pad, k_pad), np.float32)
    for o in range(cout):
        for c in range(cin):
            for l in range(lout):
                for t in range(k):
                    i = l * stride + t - pad
                    if 0 <= i < lin:
                        m[o * lout + l, c * lin + i] += w[o, c, t]
    return jnp.asarray(m, dtype)


# ---------------------------------------------------------------------------
# Pallas kernel: unrolled chain of bf16 GEMMs (weight LHS, batch-in-lanes RHS)
# + f32 leaky_relu; judge is a VPU broadcast-multiply + sublane reduction that
# lands directly in the lane-dense (1, block_b) output layout.
# ---------------------------------------------------------------------------
def _make_kernel(num_mats):
    def kernel(x_ref, *refs):
        mats = refs[:num_mats]
        judge_ref = refs[num_mats]
        out_ref = refs[num_mats + 1]
        h = x_ref[...]                              # (F, block_b) bf16 (pre-cast)
        for m_ref in mats:                          # static 4-layer unroll
            # .astype(bf16) is a no-op on the first (already-bf16) layer.
            acc = jnp.dot(m_ref[...], h.astype(jnp.bfloat16),
                          preferred_element_type=jnp.float32)   # bf16 MXU, f32 acc
            h = jnp.maximum(acc, LEAKY * acc)       # leaky_relu(0.2), f32 VPU
        # 1x1 judge conv (channels -> 1): broadcast-mul + sublane reduce.
        out = jnp.sum(h * judge_ref[...], axis=0, keepdims=True)  # (1, block_b) f32
        out_ref[...] = out.astype(out_ref.dtype)
    return kernel


def frame_discriminator_forward(x, conv_mats, judge_col, *, block_b=None):
    """x: (N, 1, feature_channels) float32 (NCW).  Returns (y, y), y: (N,1,1)."""
    n, c, f = x.shape
    assert c == 1
    # Layout plumbing: batch into lanes, bf16 at the pallas_call boundary.
    xt = x.reshape(n, f).T.astype(jnp.bfloat16)     # (F, N)

    if block_b is None:
        if n <= SINGLE_STEP_MAX:
            block_b = _round_up(max(n, 1), LANE)    # one grid step, full lanes
        else:
            # >= 2 steps so the "parallel" axis can shard across v7x's 2 TCs;
            # multiples of 256 suit every MXU generation (also /128 for v5e).
            block_b = min(MAX_BLOCK_B, _round_up((n + 1) // 2, 256))
    n_pad = _round_up(n, block_b)
    if n_pad != n:
        xt = jnp.pad(xt, ((0, 0), (0, n_pad - n)))

    in_specs = [pl.BlockSpec((f, block_b), lambda i: (0, i))]
    in_specs += [pl.BlockSpec(m.shape, lambda i: (0, 0)) for m in conv_mats]
    in_specs += [pl.BlockSpec(judge_col.shape, lambda i: (0, 0))]

    out = pl.pallas_call(
        _make_kernel(len(conv_mats)),
        out_shape=jax.ShapeDtypeStruct((1, n_pad), jnp.float32),
        grid=(n_pad // block_b,),
        in_specs=in_specs,
        out_specs=pl.BlockSpec((1, block_b), lambda i: (0, i)),   # lane-dense
        compiler_params=pltpu.CompilerParams(dimension_semantics=("parallel",)),
    )(xt, *conv_mats, judge_col)

    y = out[0, :n].reshape(n, 1, 1)
    return y, y


# ---------------------------------------------------------------------------
# Numpy reference (direct Conv1d semantics, emulating the kernel's bf16
# rounding of MXU inputs; accumulation stays f32) for verification.
# ---------------------------------------------------------------------------
def _bf16_round(a):
    return np.asarray(
        jnp.asarray(np.asarray(a, np.float32)).astype(jnp.bfloat16).astype(jnp.float32))


def _conv1d_np(x, w, stride, pad):
    b, cin, lin = x.shape
    cout, _, k = w.shape
    lout = (lin + 2 * pad - k) // stride + 1
    xp = np.pad(x, ((0, 0), (0, 0), (pad, pad)))
    out = np.zeros((b, cout, lout), np.float32)
    for l in range(lout):
        patch = xp[:, :, l * stride:l * stride + k]              # (B, Cin, K)
        out[:, :, l] = np.einsum('bck,ock->bo', patch, w)
    return out


def _reference_forward(x, conv_ws, judge_w, cfgs):
    h = np.asarray(x, np.float32)
    for w, cfg in zip(conv_ws, cfgs):
        h = _conv1d_np(_bf16_round(h), _bf16_round(w), cfg['stride'], cfg['pad'])
        h = np.maximum(h, LEAKY * h)
    y = _conv1d_np(h, np.asarray(judge_w, np.float32), 1, 0)     # judge stays f32
    return y


# ---------------------------------------------------------------------------
if __name__ == "__main__":
    key = jax.random.PRNGKey(0)
    cfgs = build_stack_configs(FEATURE_CHANNELS, CHANNELS)

    # Deterministic weights (mimics initialize_weights(): xavier_normal with
    # leaky_relu gain for stack convs, gain=1 for the judge conv).
    gain = math.sqrt(2.0 / (1.0 + LEAKY ** 2))   # calculate_gain('leaky_relu', 0.2)
    keys = jax.random.split(key, len(cfgs) + 2)
    conv_ws = [xavier_normal(keys[i], (c['cout'], c['cin'], c['k']), gain)
               for i, c in enumerate(cfgs)]
    judge_w = xavier_normal(keys[len(cfgs)], (1, CHANNELS, 1), 1.0)

    # Exact conv-as-GEMM parameter setup (glue).  Transposed band matrices in
    # bf16, narrow output/contraction dims zero-padded up to 128 lanes.
    flat_in = [c['cin'] * c['lin'] for c in cfgs]       # [16, 256, 128, 64]
    flat_out = [c['cout'] * c['lout'] for c in cfgs]    # [256, 128, 64, 32]
    pad_out = [_round_up(o, LANE) for o in flat_out]    # [256, 128, 128, 128]
    pad_in = [flat_in[0]] + pad_out[:-1]                # [16, 256, 128, 128]
    conv_mats = [conv_weight_to_matrix_T(w, c['lin'], c['lout'], c['stride'],
                                         c['pad'], k_pad=pad_in[i], m_pad=pad_out[i])
                 for i, (w, c) in enumerate(zip(conv_ws, cfgs))]
    judge_np = np.zeros((pad_out[-1], 1), np.float32)
    judge_np[:flat_out[-1], 0] = np.asarray(judge_w)[0, :, 0]
    judge_col = jnp.asarray(judge_np)                   # (128, 1) f32, zero-padded

    # Example input: N = batch * frames independent frames, NCW with Cin = 1.
    n = BATCH * FRAMES
    x = jax.random.normal(keys[-1], (n, 1, FEATURE_CHANNELS), dtype=jnp.float32)

    y, y2 = frame_discriminator_forward(x, conv_mats, judge_col)
    jax.block_until_ready(y)

    ref = _reference_forward(np.asarray(x), [np.asarray(w) for w in conv_ws],
                             np.asarray(judge_w), cfgs)
    np.testing.assert_allclose(np.asarray(y), ref, rtol=2e-2, atol=2e-3)
    assert y.shape == (n, 1, 1) and y2.shape == (n, 1, 1)

    print("KERNEL_OK")
</pallas_src>

<mosaic_0001>
module attributes {stable_mosaic.version = 11 : i64} {
  func.func @kernel(%arg0: i32, %arg1: memref<16x128xbf16, #tpu.memory_space<vmem>>, %arg2: memref<256x16xbf16, #tpu.memory_space<vmem>>, %arg3: memref<128x256xbf16, #tpu.memory_space<vmem>>, %arg4: memref<128x128xbf16, #tpu.memory_space<vmem>>, %arg5: memref<128x128xbf16, #tpu.memory_space<vmem>>, %arg6: memref<128x1xf32, #tpu.memory_space<vmem>>, %arg7: memref<1x128xf32, #tpu.memory_space<vmem>>) attributes {dimension_semantics = [#tpu.dimension_semantics<parallel>], iteration_bounds = array<i64: 1>, scalar_prefetch = 0 : i64, scratch_operands = 0 : i64, tpu.core_type = #tpu.core_type<tc>, window_params = [{transform_indices = @transform_0, window_bounds = array<i64: 16, 128>}, {pipeline_mode = #tpu.pipeline_mode<synchronous>, transform_indices = @transform_1, window_bounds = array<i64: 256, 16>}, {pipeline_mode = #tpu.pipeline_mode<synchronous>, transform_indices = @transform_2, window_bounds = array<i64: 128, 256>}, {pipeline_mode = #tpu.pipeline_mode<synchronous>, transform_indices = @transform_3, window_bounds = array<i64: 128, 128>}, {pipeline_mode = #tpu.pipeline_mode<synchronous>, transform_indices = @transform_4, window_bounds = array<i64: 128, 128>}, {pipeline_mode = #tpu.pipeline_mode<synchronous>, transform_indices = @transform_5, window_bounds = array<i64: 128, 1>}, {transform_indices = @transform_6, window_bounds = array<i64: 1, 128>}]} {
    %c0 = arith.constant 0 : index
    %c0_0 = arith.constant 0 : index
    %0 = vector.load %arg1[%c0, %c0_0] : memref<16x128xbf16, #tpu.memory_space<vmem>>, vector<16x128xbf16>
    %c0_1 = arith.constant 0 : index
    %c0_2 = arith.constant 0 : index
    %1 = vector.load %arg2[%c0_1, %c0_2] : memref<256x16xbf16, #tpu.memory_space<vmem>>, vector<256x16xbf16>
    %cst = arith.constant dense<0.000000e+00> : vector<256x128xf32>
    %2 = tpu.matmul %1, %0, %cst {dimension_numbers = #tpu.dot_dimension_numbers<[1], [0], [0], [1], [0, 0, 1, 1], [], []>} : vector<256x16xbf16>, vector<16x128xbf16>, vector<256x128xf32> -> vector<256x128xf32>
    %cst_3 = arith.constant 2.000000e-01 : f32
    %3 = vector.broadcast %cst_3 : f32 to vector<256x128xf32>
    %4 = arith.mulf %3, %2 : vector<256x128xf32>
    %5 = arith.maximumf %2, %4 : vector<256x128xf32>
    %c0_4 = arith.constant 0 : index
    %c0_5 = arith.constant 0 : index
    %6 = vector.load %arg3[%c0_4, %c0_5] : memref<128x256xbf16, #tpu.memory_space<vmem>>, vector<128x256xbf16>
    %7 = arith.truncf %5 : vector<256x128xf32> to vector<256x128xbf16>
    %cst_6 = arith.constant dense<0.000000e+00> : vector<128x128xf32>
    %8 = tpu.matmul %6, %7, %cst_6 {dimension_numbers = #tpu.dot_dimension_numbers<[1], [0], [0], [1], [0, 0, 1, 1], [], []>} : vector<128x256xbf16>, vector<256x128xbf16>, vector<128x128xf32> -> vector<128x128xf32>
    %cst_7 = arith.constant 2.000000e-01 : f32
    %9 = vector.broadcast %cst_7 : f32 to vector<128x128xf32>
    %10 = arith.mulf %9, %8 : vector<128x128xf32>
    %11 = arith.maximumf %8, %10 : vector<128x128xf32>
    %c0_8 = arith.constant 0 : index
    %c0_9 = arith.constant 0 : index
    %12 = vector.load %arg4[%c0_8, %c0_9] : memref<128x128xbf16, #tpu.memory_space<vmem>>, vector<128x128xbf16>
    %13 = arith.truncf %11 : vector<128x128xf32> to vector<128x128xbf16>
    %cst_10 = arith.constant dense<0.000000e+00> : vector<128x128xf32>
    %14 = tpu.matmul %12, %13, %cst_10 {dimension_numbers = #tpu.dot_dimension_numbers<[1], [0], [0], [1], [0, 0, 1, 1], [], []>} : vector<128x128xbf16>, vector<128x128xbf16>, vector<128x128xf32> -> vector<128x128xf32>
    %cst_11 = arith.constant 2.000000e-01 : f32
    %15 = vector.broadcast %cst_11 : f32 to vector<128x128xf32>
    %16 = arith.mulf %15, %14 : vector<128x128xf32>
    %17 = arith.maximumf %14, %16 : vector<128x128xf32>
    %c0_12 = arith.constant 0 : index
    %c0_13 = arith.constant 0 : index
    %18 = vector.load %arg5[%c0_12, %c0_13] : memref<128x128xbf16, #tpu.memory_space<vmem>>, vector<128x128xbf16>
    %19 = arith.truncf %17 : vector<128x128xf32> to vector<128x128xbf16>
    %cst_14 = arith.constant dense<0.000000e+00> : vector<128x128xf32>
    %20 = tpu.matmul %18, %19, %cst_14 {dimension_numbers = #tpu.dot_dimension_numbers<[1], [0], [0], [1], [0, 0, 1, 1], [], []>} : vector<128x128xbf16>, vector<128x128xbf16>, vector<128x128xf32> -> vector<128x128xf32>
    %cst_15 = arith.constant 2.000000e-01 : f32
    %21 = vector.broadcast %cst_15 : f32 to vector<128x128xf32>
    %22 = arith.mulf %21, %20 : vector<128x128xf32>
    %23 = arith.maximumf %20, %22 : vector<128x128xf32>
    %c0_16 = arith.constant 0 : index
    %c0_17 = arith.constant 0 : index
    %24 = vector.load %arg6[%c0_16, %c0_17] : memref<128x1xf32, #tpu.memory_space<vmem>>, vector<128x1xf32>
    %25 = vector.broadcast %24 : vector<128x1xf32> to vector<128x128xf32>
    %26 = arith.mulf %23, %25 : vector<128x128xf32>
    %cst_18 = arith.constant dense<0.000000e+00> : vector<128xf32>
    %27 = vector.multi_reduction <add>, %26, %cst_18 [0] : vector<128x128xf32> to vector<128xf32>
    %28 = vector.shape_cast %27 : vector<128xf32> to vector<1x128xf32>
    %c0_19 = arith.constant 0 : index
    %c0_20 = arith.constant 0 : index
    %29 = vector.load %arg7[%c0_19, %c0_20] : memref<1x128xf32, #tpu.memory_space<vmem>>, vector<1x128xf32>
    tpu.vector_store %arg7[%c0_19, %c0_20], %28 {strides = array<i32>} : memref<1x128xf32, #tpu.memory_space<vmem>>, vector<1x128xf32>,
    return
  }
  func.func @transform_0(%arg0: i32) -> (i32, i32) {
    %c0_i32 = arith.constant 0 : i32
    %c0_i32_0 = arith.constant 0 : i32
    return %c0_i32, %arg0 : i32, i32
  }
  func.func @transform_1(%arg0: i32) -> (i32, i32) {
    %c0_i32 = arith.constant 0 : i32
    %c0_i32_0 = arith.constant 0 : i32
    %c0_i32_1 = arith.constant 0 : i32
    return %c0_i32, %c0_i32_0 : i32, i32
  }
  func.func @transform_2(%arg0: i32) -> (i32, i32) {
    %c0_i32 = arith.constant 0 : i32
    %c0_i32_0 = arith.constant 0 : i32
    %c0_i32_1 = arith.constant 0 : i32
    return %c0_i32, %c0_i32_0 : i32, i32
  }
  func.func @transform_3(%arg0: i32) -> (i32, i32) {
    %c0_i32 = arith.constant 0 : i32
    %c0_i32_0 = arith.constant 0 : i32
    %c0_i32_1 = arith.constant 0 : i32
    return %c0_i32, %c0_i32_0 : i32, i32
  }
  func.func @transform_4(%arg0: i32) -> (i32, i32) {
    %c0_i32 = arith.constant 0 : i32
    %c0_i32_0 = arith.constant 0 : i32
    %c0_i32_1 = arith.constant 0 : i32
    return %c0_i32, %c0_i32_0 : i32, i32
  }
  func.func @transform_5(%arg0: i32) -> (i32, i32) {
    %c0_i32 = arith.constant 0 : i32
    %c0_i32_0 = arith.constant 0 : i32
    %c0_i32_1 = arith.constant 0 : i32
    return %c0_i32, %c0_i32_0 : i32, i32
  }
  func.func @transform_6(%arg0: i32) -> (i32, i32) {
    %c0_i32 = arith.constant 0 : i32
    %c0_i32_0 = arith.constant 0 : i32
    return %c0_i32, %arg0 : i32, i32
  }
}

</mosaic_0001>

<llo_original>
// kernel: tpu_custom_call.1
$region0: #{tpu_custom_call.1}
  #allocation0 [shape = 'u32[]', space=smem, size = 0x4, offset = 0x4, fixed_abs, tag = 'smem constant byte address 0x4 - core index']
  #allocation1 [shape = 'u32[144,128]{1,0:T(1,128)}', space=vmem, size = 0x12000, scoped, tag = 'internal scratch']
  %s0 = inlined_call_operand.vmem [shape: bf16[16,128], index: 0, kind: input, shape index: {}]
  %s1 = inlined_call_operand.vmem [shape: bf16[256,16], index: 1, kind: input, shape index: {}]
  %s2 = inlined_call_operand.vmem [shape: bf16[128,256], index: 2, kind: input, shape index: {}]
  %s3 = inlined_call_operand.vmem [shape: bf16[128,128], index: 3, kind: input, shape index: {}]
  %s4 = inlined_call_operand.vmem [shape: bf16[128,128], index: 4, kind: input, shape index: {}]
  %s5 = inlined_call_operand.vmem [shape: f32[128,1], index: 5, kind: input, shape index: {}]
  %s6 = inlined_call_operand.hbm [shape: f32[1,128], index: 6, kind: output, shape index: {}]
  %s7 = sld [smem:[#allocation0]]
  $region34: #{tpu_custom_call.1} parent=0
    _
  %s9 = ssub.s32 1, %s7
  %s10 = scalar_select 0, %s9, %s7
  $region1: #{tpu_custom_call.1} parent=0
    #allocation2 [shape = 'u8[512]{0}', space=vmem, size = 0x400, scoped, tag = 'output window, operand 0, single buffered']
    #allocation3 [shape = 's32[1]{0}', space=sflag, size = 0x4, scoped, tag = 'scoped memory for tpu_custom_call.1']
    %11 = vsyncpa [#allocation3], 0
    // Predicated region
    $region2: #{tpu_custom_call.1} parent=1 // pred_check
      _
    $region3: #{tpu_custom_call.1} parent=1 // pred_check_branch
      %13 = sbr.rel (0) target = $region5
    $region4: #{tpu_custom_call.1} parent=1 // pred_region
      _
    $region5: #{tpu_custom_call.1} parent=1 // pred_fallthru
      _
    // Predicated region
    $region6: #{tpu_custom_call.1} parent=1 // pred_check
      _
    $region7: #{tpu_custom_call.1} parent=1 // pred_check_branch
      %15 = sbr.rel (0) target = $region9
    $region8: #{tpu_custom_call.1} parent=1 // pred_region
      _
    $region9: #{tpu_custom_call.1} parent=1 // pred_fallthru
      _
    // Predicated region
    $region10: #{tpu_custom_call.1} parent=1 // pred_check
      _
    $region11: #{tpu_custom_call.1} parent=1 // pred_check_branch
      %17 = sbr.rel (0) target = $region13
    $region12: #{tpu_custom_call.1} parent=1 // pred_region
      _
    $region13: #{tpu_custom_call.1} parent=1 // pred_fallthru
      _
    // Predicated region
    $region14: #{tpu_custom_call.1} parent=1 // pred_check
      _
    $region15: #{tpu_custom_call.1} parent=1 // pred_check_branch
      %19 = sbr.rel (0) target = $region17
    $region16: #{tpu_custom_call.1} parent=1 // pred_region
      _
    $region17: #{tpu_custom_call.1} parent=1 // pred_fallthru
      _
    // Predicated region
    $region18: #{tpu_custom_call.1} parent=1 // pred_check
      _
    $region19: #{tpu_custom_call.1} parent=1 // pred_check_branch
      %21 = sbr.rel (0) target = $region21
    $region20: #{tpu_custom_call.1} parent=1 // pred_region
      _
    $region21: #{tpu_custom_call.1} parent=1 // pred_fallthru
      _
    // Predicated region
    $region22: #{tpu_custom_call.1} parent=1 // pred_check
      _
    $region23: #{tpu_custom_call.1} parent=1 // pred_check_branch
      %23 = sbr.rel (0) target = $region25
    $region24: #{tpu_custom_call.1} parent=1 // pred_region
      _
    $region25: #{tpu_custom_call.1} parent=1 // pred_fallthru
      _
    %v25 = vld [vmem:[%s0] sm:$0xf]
    %v26 = vld [vmem:[%s0 + $0x4] sm:$0xf]
    %v27 = vld [vmem:[%s1] sm:$0xf]
    %v28 = vld [vmem:[%s1 + $0x4] sm:$0xf]
    %v29 = vld [vmem:[%s1 + $0x8] sm:$0xf]
    %v30 = vld [vmem:[%s1 + $0xc] sm:$0xf]
    %v31 = vld [vmem:[%s1 + $0x10] sm:$0xf]
    %v32 = vld [vmem:[%s1 + $0x14] sm:$0xf]
    %v33 = vld [vmem:[%s1 + $0x18] sm:$0xf]
    %v34 = vld [vmem:[%s1 + $0x1c] sm:$0xf]
    %v35 = vld [vmem:[%s1 + $0x20] sm:$0xf]
    %v36 = vld [vmem:[%s1 + $0x24] sm:$0xf]
    %v37 = vld [vmem:[%s1 + $0x28] sm:$0xf]
    %v38 = vld [vmem:[%s1 + $0x2c] sm:$0xf]
    %v39 = vld [vmem:[%s1 + $0x30] sm:$0xf]
    %v40 = vld [vmem:[%s1 + $0x34] sm:$0xf]
    %v41 = vld [vmem:[%s1 + $0x38] sm:$0xf]
    %v42 = vld [vmem:[%s1 + $0x3c] sm:$0xf]
    %v43 = vld [vmem:[%s1 + $0x40] sm:$0xf]
    %v44 = vld [vmem:[%s1 + $0x44] sm:$0xf]
    %v45 = vld [vmem:[%s1 + $0x48] sm:$0xf]
    %v46 = vld [vmem:[%s1 + $0x4c] sm:$0xf]
    %v47 = vld [vmem:[%s1 + $0x50] sm:$0xf]
    %v48 = vld [vmem:[%s1 + $0x54] sm:$0xf]
    %v49 = vld [vmem:[%s1 + $0x58] sm:$0xf]
    %v50 = vld [vmem:[%s1 + $0x5c] sm:$0xf]
    %v51 = vld [vmem:[%s1 + $0x60] sm:$0xf]
    %v52 = vld [vmem:[%s1 + $0x64] sm:$0xf]
    %v53 = vld [vmem:[%s1 + $0x68] sm:$0xf]
    %v54 = vld [vmem:[%s1 + $0x6c] sm:$0xf]
    %v55 = vld [vmem:[%s1 + $0x70] sm:$0xf]
    %v56 = vld [vmem:[%s1 + $0x74] sm:$0xf]
    %v57 = vld [vmem:[%s1 + $0x78] sm:$0xf]
    %v58 = vld [vmem:[%s1 + $0x7c] sm:$0xf]
    %v91 = vunpack.c.l.b16 %v27
    %v92 = vunpack.c.l.b16 %v28
    %v93 = vunpack.c.l.b16 %v29
    %v94 = vunpack.c.l.b16 %v30
    %v95 = vunpack.c.l.b16 %v31
    %v96 = vunpack.c.l.b16 %v32
    %v97 = vunpack.c.l.b16 %v33
    %v98 = vunpack.c.l.b16 %v34
    %v99 = vunpack.c.l.b16 %v35
    %v100 = vunpack.c.l.b16 %v36
    %v101 = vunpack.c.l.b16 %v37
    %v102 = vunpack.c.l.b16 %v38
    %v103 = vunpack.c.l.b16 %v39
    %v104 = vunpack.c.l.b16 %v40
    %v105 = vunpack.c.l.b16 %v41
    %v106 = vunpack.c.l.b16 %v42
    %v107 = vunpack.c.l.b16 %v43
    %v108 = vunpack.c.l.b16 %v44
    %v109 = vunpack.c.l.b16 %v45
    %v110 = vunpack.c.l.b16 %v46
    %v111 = vunpack.c.l.b16 %v47
    %v112 = vunpack.c.l.b16 %v48
    %v113 = vunpack.c.l.b16 %v49
    %v114 = vunpack.c.l.b16 %v50
    %v115 = vunpack.c.l.b16 %v51
    %v116 = vunpack.c.l.b16 %v52
    %v117 = vunpack.c.l.b16 %v53
    %v118 = vunpack.c.l.b16 %v54
    %v119 = vunpack.c.l.b16 %v55
    %v120 = vunpack.c.l.b16 %v56
    %v121 = vunpack.c.l.b16 %v57
    %v122 = vunpack.c.l.b16 %v58
    %v123 = vpack.c.b16 %v92, %v91
    %v124 = vpack.c.b16 %v94, %v93
    %v125 = vpack.c.b16 %v96, %v95
    %v126 = vpack.c.b16 %v98, %v97
    %v127 = vpack.c.b16 %v100, %v99
    %v128 = vpack.c.b16 %v102, %v101
    %v129 = vpack.c.b16 %v104, %v103
    %v130 = vpack.c.b16 %v106, %v105
    %v131 = vpack.c.b16 %v108, %v107
    %v132 = vpack.c.b16 %v110, %v109
    %v133 = vpack.c.b16 %v112, %v111
    %v134 = vpack.c.b16 %v114, %v113
    %v135 = vpack.c.b16 %v116, %v115
    %v136 = vpack.c.b16 %v118, %v117
    %v137 = vpack.c.b16 %v120, %v119
    %v138 = vpack.c.b16 %v122, %v121
    %v141 = vunpack.c.l.b16 %v25
    %v142 = vunpack.c.l.b16 %v26
    %v143 = vpack.c.b16 %v142, %v141
    %vm145 = vcmask 130048
    %v147 = vsel %vm145, %v123, 0
    %v150 = vsel %vm145, %v124, 0
    %v153 = vsel %vm145, %v125, 0
    %v156 = vsel %vm145, %v126, 0
    %v159 = vsel %vm145, %v127, 0
    %v162 = vsel %vm145, %v128, 0
    %v165 = vsel %vm145, %v129, 0
    %v168 = vsel %vm145, %v130, 0
    %v171 = vsel %vm145, %v131, 0
    %v174 = vsel %vm145, %v132, 0
    %v177 = vsel %vm145, %v133, 0
    %v180 = vsel %vm145, %v134, 0
    %v183 = vsel %vm145, %v135, 0
    %v186 = vsel %vm145, %v136, 0
    %v189 = vsel %vm145, %v137, 0
    %v192 = vsel %vm145, %v138, 0
    %194 = vmatprep.subr.bf16.mxu0 0
    %195 = vmatpush1.bf16.msra.mxu0 %v143
    %196 = vmatprep.subr.bf16.mxu0 0
    %197 = vmatpush1.bf16.msra.mxu0 0
    %198 = vmatprep.subr.bf16.mxu0 0
    %199 = vmatpush1.bf16.msra.mxu0 0
    %200 = vmatprep.subr.bf16.mxu0 0
    %201 = vmatpush1.bf16.msra.mxu0 0
    %202 = vmatprep.subr.bf16.mxu0 0
    %203 = vmatpush1.bf16.msra.mxu0 0
    %204 = vmatprep.subr.bf16.mxu0 0
    %205 = vmatpush1.bf16.msra.mxu0 0
    %206 = vmatprep.subr.bf16.mxu0 0
    %207 = vmatpush1.bf16.msra.mxu0 0
    %208 = vmatprep.subr.bf16.mxu0 0
    %209 = vmatpush1.bf16.msra.mxu0 0
    %210 = vmatprep.subr.bf16.mxu0 0
    %211 = vmatpush1.bf16.msra.mxu0 0
    %212 = vmatprep.subr.bf16.mxu0 0
    %213 = vmatpush1.bf16.msra.mxu0 0
    %214 = vmatprep.subr.bf16.mxu0 0
    %215 = vmatpush1.bf16.msra.mxu0 0
    %216 = vmatprep.subr.bf16.mxu0 0
    %217 = vmatpush1.bf16.msra.mxu0 0
    %218 = vmatprep.subr.bf16.mxu0 0
    %219 = vmatpush1.bf16.msra.mxu0 0
    %220 = vmatprep.subr.bf16.mxu0 0
    %221 = vmatpush1.bf16.msra.mxu0 0
    %222 = vmatprep.subr.bf16.mxu0 0
    %223 = vmatpush1.bf16.msra.mxu0 0
    %224 = vmatprep.subr.bf16.mxu0 0
    %225 = vmatpush1.bf16.msra.mxu0 0
    %226 = vmatprep.mubr.bf16.mxu0 0
    %227 = vmatmul.mubr.bf16.gmra.mrb[0].mxu0 %v147
    %v228 = vpop.f32.mrb[0].mxu0
    %v229 = vadd.f32 0.0, %v228
    %v230 = vpop.f32.mrb[0].mxu0
    %v231 = vpop.f32.mrb[0].mxu0
    %v232 = vadd.f32 0.0, %v231
    %v233 = vpop.f32.mrb[0].mxu0
    %234 = vmatprep.mubr.bf16.mxu0 0
    %235 = vmatmul.mubr.bf16.gmra.mrb[0].mxu0 %v150
    %v236 = vpop.f32.mrb[0].mxu0
    %v237 = vadd.f32 0.0, %v236
    %v238 = vpop.f32.mrb[0].mxu0
    %v239 = vpop.f32.mrb[0].mxu0
    %v240 = vadd.f32 0.0, %v239
    %v241 = vpop.f32.mrb[0].mxu0
    %242 = vmatprep.mubr.bf16.mxu0 0
    %243 = vmatmul.mubr.bf16.gmra.mrb[0].mxu0 %v153
    %v244 = vpop.f32.mrb[0].mxu0
    %v245 = vadd.f32 0.0, %v244
    %v246 = vpop.f32.mrb[0].mxu0
    %v247 = vpop.f32.mrb[0].mxu0
    %v248 = vadd.f32 0.0, %v247
    %v249 = vpop.f32.mrb[0].mxu0
    %250 = vmatprep.mubr.bf16.mxu0 0
    %251 = vmatmul.mubr.bf16.gmra.mrb[0].mxu0 %v156
    %v252 = vpop.f32.mrb[0].mxu0
    %v253 = vadd.f32 0.0, %v252
    %v254 = vpop.f32.mrb[0].mxu0
    %v255 = vpop.f32.mrb[0].mxu0
    %v256 = vadd.f32 0.0, %v255
    %v257 = vpop.f32.mrb[0].mxu0
    %258 = vmatprep.mubr.bf16.mxu0 0
    %259 = vmatmul.mubr.bf16.gmra.mrb[0].mxu0 %v159
    %v260 = vpop.f32.mrb[0].mxu0
    %v261 = vadd.f32 0.0, %v260
    %v262 = vpop.f32.mrb[0].mxu0
    %v263 = vpop.f32.mrb[0].mxu0
    %v264 = vadd.f32 0.0, %v263
    %v265 = vpop.f32.mrb[0].mxu0
    %266 = vmatprep.mubr.bf16.mxu0 0
    %267 = vmatmul.mubr.bf16.gmra.mrb[0].mxu0 %v162
    %v268 = vpop.f32.mrb[0].mxu0
    %v269 = vadd.f32 0.0, %v268
    %v270 = vpop.f32.mrb[0].mxu0
    %v271 = vpop.f32.mrb[0].mxu0
    %v272 = vadd.f32 0.0, %v271
    %v273 = vpop.f32.mrb[0].mxu0
    %274 = vmatprep.mubr.bf16.mxu0 0
    %275 = vmatmul.mubr.bf16.gmra.mrb[0].mxu0 %v165
    %v276 = vpop.f32.mrb[0].mxu0
    %v277 = vadd.f32 0.0, %v276
    %v278 = vpop.f32.mrb[0].mxu0
    %v279 = vpop.f32.mrb[0].mxu0
    %v280 = vadd.f32 0.0, %v279
    %v281 = vpop.f32.mrb[0].mxu0
    %282 = vmatprep.mubr.bf16.mxu0 0
    %283 = vmatmul.mubr.bf16.gmra.mrb[0].mxu0 %v168
    %v284 = vpop.f32.mrb[0].mxu0
    %v285 = vadd.f32 0.0, %v284
    %v286 = vpop.f32.mrb[0].mxu0
    %v287 = vpop.f32.mrb[0].mxu0
    %v288 = vadd.f32 0.0, %v287
    %v289 = vpop.f32.mrb[0].mxu0
    %290 = vmatprep.mubr.bf16.mxu0 0
    %291 = vmatmul.mubr.bf16.gmra.mrb[0].mxu0 %v171
    %v292 = vpop.f32.mrb[0].mxu0
    %v293 = vadd.f32 0.0, %v292
    %v294 = vpop.f32.mrb[0].mxu0
    %v295 = vpop.f32.mrb[0].mxu0
    %v296 = vadd.f32 0.0, %v295
    %v297 = vpop.f32.mrb[0].mxu0
    %298 = vmatprep.mubr.bf16.mxu0 0
    %299 = vmatmul.mubr.bf16.gmra.mrb[0].mxu0 %v174
    %v300 = vpop.f32.mrb[0].mxu0
    %v301 = vadd.f32 0.0, %v300
    %v302 = vpop.f32.mrb[0].mxu0
    %v303 = vpop.f32.mrb[0].mxu0
    %v304 = vadd.f32 0.0, %v303
    %v305 = vpop.f32.mrb[0].mxu0
    %306 = vmatprep.mubr.bf16.mxu0 0
    %307 = vmatmul.mubr.bf16.gmra.mrb[0].mxu0 %v177
    %v308 = vpop.f32.mrb[0].mxu0
    %v309 = vadd.f32 0.0, %v308
    %v310 = vpop.f32.mrb[0].mxu0
    %v311 = vpop.f32.mrb[0].mxu0
    %v312 = vadd.f32 0.0, %v311
    %v313 = vpop.f32.mrb[0].mxu0
    %314 = vmatprep.mubr.bf16.mxu0 0
    %315 = vmatmul.mubr.bf16.gmra.mrb[0].mxu0 %v180
    %v316 = vpop.f32.mrb[0].mxu0
    %v317 = vadd.f32 0.0, %v316
    %v318 = vpop.f32.mrb[0].mxu0
    %v319 = vpop.f32.mrb[0].mxu0
    %v320 = vadd.f32 0.0, %v319
    %v321 = vpop.f32.mrb[0].mxu0
    %322 = vmatprep.mubr.bf16.mxu0 0
    %323 = vmatmul.mubr.bf16.gmra.mrb[0].mxu0 %v183
    %v324 = vpop.f32.mrb[0].mxu0
    %v325 = vadd.f32 0.0, %v324
    %v326 = vpop.f32.mrb[0].mxu0
    %v327 = vpop.f32.mrb[0].mxu0
    %v328 = vadd.f32 0.0, %v327
    %v329 = vpop.f32.mrb[0].mxu0
    %330 = vmatprep.mubr.bf16.mxu0 0
    %331 = vmatmul.mubr.bf16.gmra.mrb[0].mxu0 %v186
    %v332 = vpop.f32.mrb[0].mxu0
    %v333 = vadd.f32 0.0, %v332
    %v334 = vpop.f32.mrb[0].mxu0
    %v335 = vpop.f32.mrb[0].mxu0
    %v336 = vadd.f32 0.0, %v335
    %v337 = vpop.f32.mrb[0].mxu0
    %338 = vmatprep.mubr.bf16.mxu0 0
    %339 = vmatmul.mubr.bf16.gmra.mrb[0].mxu0 %v189
    %v340 = vpop.f32.mrb[0].mxu0
    %v341 = vadd.f32 0.0, %v340
    %v342 = vpop.f32.mrb[0].mxu0
    %v343 = vpop.f32.mrb[0].mxu0
    %v344 = vadd.f32 0.0, %v343
    %v345 = vpop.f32.mrb[0].mxu0
    %346 = vmatprep.mubr.bf16.mxu0 0
    %347 = vmatmul.mubr.bf16.gmra.mrb[0].mxu0 %v192
    %v348 = vpop.f32.mrb[0].mxu0
    %v349 = vadd.f32 0.0, %v348
    %v350 = vpop.f32.mrb[0].mxu0
    %v351 = vpop.f32.mrb[0].mxu0
    %v352 = vadd.f32 0.0, %v351
    %v353 = vpop.f32.mrb[0].mxu0
    %354 = vdwg.mxu0
    %v355 = vmul.f32 %v229, 0.2
    %v356 = vmul.f32 %v232, 0.2
    %v357 = vmul.f32 %v237, 0.2
    %v358 = vmul.f32 %v240, 0.2
    %v359 = vmul.f32 %v245, 0.2
    %v360 = vmul.f32 %v248, 0.2
    %v361 = vmul.f32 %v253, 0.2
    %v362 = vmul.f32 %v256, 0.2
    %v363 = vmul.f32 %v261, 0.2
    %v364 = vmul.f32 %v264, 0.2
    %v365 = vmul.f32 %v269, 0.2
    %v366 = vmul.f32 %v272, 0.2
    %v367 = vmul.f32 %v277, 0.2
    %v368 = vmul.f32 %v280, 0.2
    %v369 = vmul.f32 %v285, 0.2
    %v370 = vmul.f32 %v288, 0.2
    %v371 = vmul.f32 %v293, 0.2
    %v372 = vmul.f32 %v296, 0.2
    %v373 = vmul.f32 %v301, 0.2
    %v374 = vmul.f32 %v304, 0.2
    %v375 = vmul.f32 %v309, 0.2
    %v376 = vmul.f32 %v312, 0.2
    %v377 = vmul.f32 %v317, 0.2
    %v378 = vmul.f32 %v320, 0.2
    %v379 = vmul.f32 %v325, 0.2
    %v380 = vmul.f32 %v328, 0.2
    %v381 = vmul.f32 %v333, 0.2
    %v382 = vmul.f32 %v336, 0.2
    %v383 = vmul.f32 %v341, 0.2
    %v384 = vmul.f32 %v344, 0.2
    %v385 = vmul.f32 %v349, 0.2
    %v386 = vmul.f32 %v352, 0.2
    %v387 = vmax.f32 %v229, %v355
    %v388 = vmax.f32 %v232, %v356
    %v389 = vmax.f32 %v237, %v357
    %v390 = vmax.f32 %v240, %v358
    %v391 = vmax.f32 %v245, %v359
    %v392 = vmax.f32 %v248, %v360
    %v393 = vmax.f32 %v253, %v361
    %v394 = vmax.f32 %v256, %v362
    %v395 = vmax.f32 %v261, %v363
    %v396 = vmax.f32 %v264, %v364
    %v397 = vmax.f32 %v269, %v365
    %v398 = vmax.f32 %v272, %v366
    %v399 = vmax.f32 %v277, %v367
    %v400 = vmax.f32 %v280, %v368
    %v401 = vmax.f32 %v285, %v369
    %v402 = vmax.f32 %v288, %v370
    %v403 = vmax.f32 %v293, %v371
    %v404 = vmax.f32 %v296, %v372
    %v405 = vmax.f32 %v301, %v373
    %v406 = vmax.f32 %v304, %v374
    %v407 = vmax.f32 %v309, %v375
    %v408 = vmax.f32 %v312, %v376
    %v409 = vmax.f32 %v317, %v377
    %v410 = vmax.f32 %v320, %v378
    %v411 = vmax.f32 %v325, %v379
    %v412 = vmax.f32 %v328, %v380
    %v413 = vmax.f32 %v333, %v381
    %v414 = vmax.f32 %v336, %v382
    %v415 = vmax.f32 %v341, %v383
    %v416 = vmax.f32 %v344, %v384
    %v417 = vmax.f32 %v349, %v385
    %v418 = vmax.f32 %v352, %v386
    %v419 = vld [vmem:[%s2] sm:$0xff]
    %v420 = vld [vmem:[%s2 + $0x8] sm:$0xff]
    %v421 = vld [vmem:[%s2 + $0x10] sm:$0xff]
    %v422 = vld [vmem:[%s2 + $0x18] sm:$0xff]
    %v423 = vld [vmem:[%s2 + $0x20] sm:$0xff]
    %v424 = vld [vmem:[%s2 + $0x28] sm:$0xff]
    %v425 = vld [vmem:[%s2 + $0x30] sm:$0xff]
    %v426 = vld [vmem:[%s2 + $0x38] sm:$0xff]
    %v427 = vld [vmem:[%s2 + $0x40] sm:$0xff]
    %v428 = vld [vmem:[%s2 + $0x48] sm:$0xff]
    %v429 = vld [vmem:[%s2 + $0x50] sm:$0xff]
    %v430 = vld [vmem:[%s2 + $0x58] sm:$0xff]
    %v431 = vld [vmem:[%s2 + $0x60] sm:$0xff]
    %v432 = vld [vmem:[%s2 + $0x68] sm:$0xff]
    %v433 = vld [vmem:[%s2 + $0x70] sm:$0xff]
    %v434 = vld [vmem:[%s2 + $0x78] sm:$0xff]
    %v435 = vpack.c.bf16 %v388, %v387
    %v436 = vpack.c.bf16 %v390, %v389
    %v437 = vpack.c.bf16 %v392, %v391
    %v438 = vpack.c.bf16 %v394, %v393
    %v439 = vpack.c.bf16 %v396, %v395
    %v440 = vpack.c.bf16 %v398, %v397
    %v441 = vpack.c.bf16 %v400, %v399
    %v442 = vpack.c.bf16 %v402, %v401
    %v443 = vpack.c.bf16 %v404, %v403
    %v444 = vpack.c.bf16 %v406, %v405
    %v445 = vpack.c.bf16 %v408, %v407
    %v446 = vpack.c.bf16 %v410, %v409
    %v447 = vpack.c.bf16 %v412, %v411
    %v448 = vpack.c.bf16 %v414, %v413
    %v449 = vpack.c.bf16 %v416, %v415
    %v450 = vpack.c.bf16 %v418, %v417
    %v467 = vunpack.c.l.b16 %v419
    %v468 = vunpack.c.h.b16 %v419
    %v469 = vunpack.c.l.b16 %v420
    %v470 = vunpack.c.h.b16 %v420
    %v471 = vunpack.c.l.b16 %v421
    %v472 = vunpack.c.h.b16 %v421
    %v473 = vunpack.c.l.b16 %v422
    %v474 = vunpack.c.h.b16 %v422
    %v475 = vunpack.c.l.b16 %v423
    %v476 = vunpack.c.h.b16 %v423
    %v477 = vunpack.c.l.b16 %v424
    %v478 = vunpack.c.h.b16 %v424
    %v479 = vunpack.c.l.b16 %v425
    %v480 = vunpack.c.h.b16 %v425
    %v481 = vunpack.c.l.b16 %v426
    %v482 = vunpack.c.h.b16 %v426
    %v483 = vunpack.c.l.b16 %v427
    %v484 = vunpack.c.h.b16 %v427
    %v485 = vunpack.c.l.b16 %v428
    %v486 = vunpack.c.h.b16 %v428
    %v487 = vunpack.c.l.b16 %v429
    %v488 = vunpack.c.h.b16 %v429
    %v489 = vunpack.c.l.b16 %v430
    %v490 = vunpack.c.h.b16 %v430
    %v491 = vunpack.c.l.b16 %v431
    %v492 = vunpack.c.h.b16 %v431
    %v493 = vunpack.c.l.b16 %v432
    %v494 = vunpack.c.h.b16 %v432
    %v495 = vunpack.c.l.b16 %v433
    %v496 = vunpack.c.h.b16 %v433
    %v497 = vunpack.c.l.b16 %v434
    %v498 = vunpack.c.h.b16 %v434
    %v499 = vpack.c.b16 %v469, %v467
    %v500 = vpack.c.b16 %v470, %v468
    %v501 = vpack.c.b16 %v473, %v471
    %v502 = vpack.c.b16 %v474, %v472
    %v503 = vpack.c.b16 %v477, %v475
    %v504 = vpack.c.b16 %v478, %v476
    %v505 = vpack.c.b16 %v481, %v479
    %v506 = vpack.c.b16 %v482, %v480
    %v507 = vpack.c.b16 %v485, %v483
    %v508 = vpack.c.b16 %v486, %v484
    %v509 = vpack.c.b16 %v489, %v487
    %v510 = vpack.c.b16 %v490, %v488
    %v511 = vpack.c.b16 %v493, %v491
    %v512 = vpack.c.b16 %v494, %v492
    %v513 = vpack.c.b16 %v497, %v495
    %v514 = vpack.c.b16 %v498, %v496
    %531 = vmatprep.subr.bf16.mxu0 0
    %532 = vmatpush1.bf16.msra.mxu0 %v435
    %533 = vmatprep.subr.bf16.mxu0 0
    %534 = vmatpush1.bf16.msra.mxu0 %v436
    %535 = vmatprep.subr.bf16.mxu0 0
    %536 = vmatpush1.bf16.msra.mxu0 %v437
    %537 = vmatprep.subr.bf16.mxu0 0
    %538 = vmatpush1.bf16.msra.mxu0 %v438
    %539 = vmatprep.subr.bf16.mxu0 0
    %540 = vmatpush1.bf16.msra.mxu0 %v439
    %541 = vmatprep.subr.bf16.mxu0 0
    %542 = vmatpush1.bf16.msra.mxu0 %v440
    %543 = vmatprep.subr.bf16.mxu0 0
    %544 = vmatpush1.bf16.msra.mxu0 %v441
    %545 = vmatprep.subr.bf16.mxu0 0
    %546 = vmatpush1.bf16.msra.mxu0 %v442
    %547 = vmatprep.subr.bf16.mxu0 0
    %548 = vmatpush1.bf16.msra.mxu0 %v443
    %549 = vmatprep.subr.bf16.mxu0 0
    %550 = vmatpush1.bf16.msra.mxu0 %v444
    %551 = vmatprep.subr.bf16.mxu0 0
    %552 = vmatpush1.bf16.msra.mxu0 %v445
    %553 = vmatprep.subr.bf16.mxu0 0
    %554 = vmatpush1.bf16.msra.mxu0 %v446
    %555 = vmatprep.subr.bf16.mxu0 0
    %556 = vmatpush1.bf16.msra.mxu0 %v447
    %557 = vmatprep.subr.bf16.mxu0 0
    %558 = vmatpush1.bf16.msra.mxu0 %v448
    %559 = vmatprep.subr.bf16.mxu0 0
    %560 = vmatpush1.bf16.msra.mxu0 %v449
    %561 = vmatprep.subr.bf16.mxu0 0
    %562 = vmatpush1.bf16.msra.mxu0 %v450
    %563 = vmatprep.mubr.bf16.mxu0 %v500
    %564 = vmatmul.mubr.bf16.gmra.mrb[0].mxu0 %v499
    %v565 = vpop.f32.mrb[0].mxu0
    %v566 = vadd.f32 0.0, %v565
    %v567 = vpop.f32.mrb[0].mxu0
    %v568 = vpop.f32.mrb[0].mxu0
    %v569 = vadd.f32 0.0, %v568
    %v570 = vpop.f32.mrb[0].mxu0
    %571 = vmatprep.mubr.bf16.mxu0 %v502
    %572 = vmatmul.mubr.bf16.gmra.mrb[0].mxu0 %v501
    %v573 = vpop.f32.mrb[0].mxu0
    %v574 = vadd.f32 0.0, %v573
    %v575 = vpop.f32.mrb[0].mxu0
    %v576 = vpop.f32.mrb[0].mxu0
    %v577 = vadd.f32 0.0, %v576
    %v578 = vpop.f32.mrb[0].mxu0
    %579 = vmatprep.mubr.bf16.mxu0 %v504
    %580 = vmatmul.mubr.bf16.gmra.mrb[0].mxu0 %v503
    %v581 = vpop.f32.mrb[0].mxu0
    %v582 = vadd.f32 0.0, %v581
    %v583 = vpop.f32.mrb[0].mxu0
    %v584 = vpop.f32.mrb[0].mxu0
    %v585 = vadd.f32 0.0, %v584
    %v586 = vpop.f32.mrb[0].mxu0
    %587 = vmatprep.mubr.bf16.mxu0 %v506
    %588 = vmatmul.mubr.bf16.gmra.mrb[0].mxu0 %v505
    %v589 = vpop.f32.mrb[0].mxu0
    %v590 = vadd.f32 0.0, %v589
    %v591 = vpop.f32.mrb[0].mxu0
    %v592 = vpop.f32.mrb[0].mxu0
    %v593 = vadd.f32 0.0, %v592
    %v594 = vpop.f32.mrb[0].mxu0
    %595 = vmatprep.mubr.bf16.mxu0 %v508
    %596 = vmatmul.mubr.bf16.gmra.mrb[0].mxu0 %v507
    %v597 = vpop.f32.mrb[0].mxu0
    %v598 = vadd.f32 0.0, %v597
    %v599 = vpop.f32.mrb[0].mxu0
    %v600 = vpop.f32.mrb[0].mxu0
    %v601 = vadd.f32 0.0, %v600
    %v602 = vpop.f32.mrb[0].mxu0
    %603 = vmatprep.mubr.bf16.mxu0 %v510
    %604 = vmatmul.mubr.bf16.gmra.mrb[0].mxu0 %v509
    %v605 = vpop.f32.mrb[0].mxu0
    %v606 = vadd.f32 0.0, %v605
    %v607 = vpop.f32.mrb[0].mxu0
    %v608 = vpop.f32.mrb[0].mxu0
    %v609 = vadd.f32 0.0, %v608
    %v610 = vpop.f32.mrb[0].mxu0
    %611 = vmatprep.mubr.bf16.mxu0 %v512
    %612 = vmatmul.mubr.bf16.gmra.mrb[0].mxu0 %v511
    %v613 = vpop.f32.mrb[0].mxu0
    %v614 = vadd.f32 0.0, %v613
    %v615 = vpop.f32.mrb[0].mxu0
    %v616 = vpop.f32.mrb[0].mxu0
    %v617 = vadd.f32 0.0, %v616
    %v618 = vpop.f32.mrb[0].mxu0
    %619 = vmatprep.mubr.bf16.mxu0 %v514
    %620 = vmatmul.mubr.bf16.gmra.mrb[0].mxu0 %v513
    %v621 = vpop.f32.mrb[0].mxu0
    %v622 = vadd.f32 0.0, %v621
    %v623 = vpop.f32.mrb[0].mxu0
    %v624 = vpop.f32.mrb[0].mxu0
    %v625 = vadd.f32 0.0, %v624
    %v626 = vpop.f32.mrb[0].mxu0
    %627 = vdwg.mxu0
    %v628 = vmul.f32 %v566, 0.2
    %v629 = vmul.f32 %v569, 0.2
    %v630 = vmul.f32 %v574, 0.2
    %v631 = vmul.f32 %v577, 0.2
    %v632 = vmul.f32 %v582, 0.2
    %v633 = vmul.f32 %v585, 0.2
    %v634 = vmul.f32 %v590, 0.2
    %v635 = vmul.f32 %v593, 0.2
    %v636 = vmul.f32 %v598, 0.2
    %v637 = vmul.f32 %v601, 0.2
    %v638 = vmul.f32 %v606, 0.2
    %v639 = vmul.f32 %v609, 0.2
    %v640 = vmul.f32 %v614, 0.2
    %v641 = vmul.f32 %v617, 0.2
    %v642 = vmul.f32 %v622, 0.2
    %v643 = vmul.f32 %v625, 0.2
    %v644 = vmax.f32 %v566, %v628
    %v645 = vmax.f32 %v569, %v629
    %v646 = vmax.f32 %v574, %v630
    %v647 = vmax.f32 %v577, %v631
    %v648 = vmax.f32 %v582, %v632
    %v649 = vmax.f32 %v585, %v633
    %v650 = vmax.f32 %v590, %v634
    %v651 = vmax.f32 %v593, %v635
    %v652 = vmax.f32 %v598, %v636
    %v653 = vmax.f32 %v601, %v637
    %v654 = vmax.f32 %v606, %v638
    %v655 = vmax.f32 %v609, %v639
    %v656 = vmax.f32 %v614, %v640
    %v657 = vmax.f32 %v617, %v641
    %v658 = vmax.f32 %v622, %v642
    %v659 = vmax.f32 %v625, %v643
    %v660 = vld [vmem:[%s3] sm:$0xf]
    %v661 = vld [vmem:[%s3 + $0x4] sm:$0xf]
    %v662 = vld [vmem:[%s3 + $0x8] sm:$0xf]
    %v663 = vld [vmem:[%s3 + $0xc] sm:$0xf]
    %v664 = vld [vmem:[%s3 + $0x10] sm:$0xf]
    %v665 = vld [vmem:[%s3 + $0x14] sm:$0xf]
    %v666 = vld [vmem:[%s3 + $0x18] sm:$0xf]
    %v667 = vld [vmem:[%s3 + $0x1c] sm:$0xf]
    %v668 = vld [vmem:[%s3 + $0x20] sm:$0xf]
    %v669 = vld [vmem:[%s3 + $0x24] sm:$0xf]
    %v670 = vld [vmem:[%s3 + $0x28] sm:$0xf]
    %v671 = vld [vmem:[%s3 + $0x2c] sm:$0xf]
    %v672 = vld [vmem:[%s3 + $0x30] sm:$0xf]
    %v673 = vld [vmem:[%s3 + $0x34] sm:$0xf]
    %v674 = vld [vmem:[%s3 + $0x38] sm:$0xf]
    %v675 = vld [vmem:[%s3 + $0x3c] sm:$0xf]
    %v676 = vpack.c.bf16 %v645, %v644
    %v677 = vpack.c.bf16 %v647, %v646
    %v678 = vpack.c.bf16 %v649, %v648
    %v679 = vpack.c.bf16 %v651, %v650
    %v680 = vpack.c.bf16 %v653, %v652
    %v681 = vpack.c.bf16 %v655, %v654
    %v682 = vpack.c.bf16 %v657, %v656
    %v683 = vpack.c.bf16 %v659, %v658
    %v700 = vunpack.c.l.b16 %v660
    %v701 = vunpack.c.l.b16 %v661
    %v702 = vunpack.c.l.b16 %v662
    %v703 = vunpack.c.l.b16 %v663
    %v704 = vunpack.c.l.b16 %v664
    %v705 = vunpack.c.l.b16 %v665
    %v706 = vunpack.c.l.b16 %v666
    %v707 = vunpack.c.l.b16 %v667
    %v708 = vunpack.c.l.b16 %v668
    %v709 = vunpack.c.l.b16 %v669
    %v710 = vunpack.c.l.b16 %v670
    %v711 = vunpack.c.l.b16 %v671
    %v712 = vunpack.c.l.b16 %v672
    %v713 = vunpack.c.l.b16 %v673
    %v714 = vunpack.c.l.b16 %v674
    %v715 = vunpack.c.l.b16 %v675
    %v716 = vpack.c.b16 %v701, %v700
    %v717 = vpack.c.b16 %v703, %v702
    %v718 = vpack.c.b16 %v705, %v704
    %v719 = vpack.c.b16 %v707, %v706
    %v720 = vpack.c.b16 %v709, %v708
    %v721 = vpack.c.b16 %v711, %v710
    %v722 = vpack.c.b16 %v713, %v712
    %v723 = vpack.c.b16 %v715, %v714
    %732 = vmatprep.subr.bf16.mxu0 0
    %733 = vmatpush1.bf16.msra.mxu0 %v676
    %734 = vmatprep.subr.bf16.mxu0 0
    %735 = vmatpush1.bf16.msra.mxu0 %v677
    %736 = vmatprep.subr.bf16.mxu0 0
    %737 = vmatpush1.bf16.msra.mxu0 %v678
    %738 = vmatprep.subr.bf16.mxu0 0
    %739 = vmatpush1.bf16.msra.mxu0 %v679
    %740 = vmatprep.subr.bf16.mxu0 0
    %741 = vmatpush1.bf16.msra.mxu0 %v680
    %742 = vmatprep.subr.bf16.mxu0 0
    %743 = vmatpush1.bf16.msra.mxu0 %v681
    %744 = vmatprep.subr.bf16.mxu0 0
    %745 = vmatpush1.bf16.msra.mxu0 %v682
    %746 = vmatprep.subr.bf16.mxu0 0
    %747 = vmatpush1.bf16.msra.mxu0 %v683
    %748 = vmatprep.subr.bf16.mxu0 0
    %749 = vmatpush1.bf16.msra.mxu0 0
    %750 = vmatprep.subr.bf16.mxu0 0
    %751 = vmatpush1.bf16.msra.mxu0 0
    %752 = vmatprep.subr.bf16.mxu0 0
    %753 = vmatpush1.bf16.msra.mxu0 0
    %754 = vmatprep.subr.bf16.mxu0 0
    %755 = vmatpush1.bf16.msra.mxu0 0
    %756 = vmatprep.subr.bf16.mxu0 0
    %757 = vmatpush1.bf16.msra.mxu0 0
    %758 = vmatprep.subr.bf16.mxu0 0
    %759 = vmatpush1.bf16.msra.mxu0 0
    %760 = vmatprep.subr.bf16.mxu0 0
    %761 = vmatpush1.bf16.msra.mxu0 0
    %762 = vmatprep.subr.bf16.mxu0 0
    %763 = vmatpush1.bf16.msra.mxu0 0
    %764 = vmatprep.mubr.bf16.mxu0 0
    %765 = vmatmul.mubr.bf16.gmra.mrb[0].mxu0 %v716
    %v766 = vpop.f32.mrb[0].mxu0
    %v767 = vadd.f32 0.0, %v766
    %v768 = vpop.f32.mrb[0].mxu0
    %v769 = vpop.f32.mrb[0].mxu0
    %v770 = vadd.f32 0.0, %v769
    %v771 = vpop.f32.mrb[0].mxu0
    %772 = vmatprep.mubr.bf16.mxu0 0
    %773 = vmatmul.mubr.bf16.gmra.mrb[0].mxu0 %v717
    %v774 = vpop.f32.mrb[0].mxu0
    %v775 = vadd.f32 0.0, %v774
    %v776 = vpop.f32.mrb[0].mxu0
    %v777 = vpop.f32.mrb[0].mxu0
    %v778 = vadd.f32 0.0, %v777
    %v779 = vpop.f32.mrb[0].mxu0
    %780 = vmatprep.mubr.bf16.mxu0 0
    %781 = vmatmul.mubr.bf16.gmra.mrb[0].mxu0 %v718
    %v782 = vpop.f32.mrb[0].mxu0
    %v783 = vadd.f32 0.0, %v782
    %v784 = vpop.f32.mrb[0].mxu0
    %v785 = vpop.f32.mrb[0].mxu0
    %v786 = vadd.f32 0.0, %v785
    %v787 = vpop.f32.mrb[0].mxu0
    %788 = vmatprep.mubr.bf16.mxu0 0
    %789 = vmatmul.mubr.bf16.gmra.mrb[0].mxu0 %v719
    %v790 = vpop.f32.mrb[0].mxu0
    %v791 = vadd.f32 0.0, %v790
    %v792 = vpop.f32.mrb[0].mxu0
    %v793 = vpop.f32.mrb[0].mxu0
    %v794 = vadd.f32 0.0, %v793
    %v795 = vpop.f32.mrb[0].mxu0
    %796 = vmatprep.mubr.bf16.mxu0 0
    %797 = vmatmul.mubr.bf16.gmra.mrb[0].mxu0 %v720
    %v798 = vpop.f32.mrb[0].mxu0
    %v799 = vadd.f32 0.0, %v798
    %v800 = vpop.f32.mrb[0].mxu0
    %v801 = vpop.f32.mrb[0].mxu0
    %v802 = vadd.f32 0.0, %v801
    %v803 = vpop.f32.mrb[0].mxu0
    %804 = vmatprep.mubr.bf16.mxu0 0
    %805 = vmatmul.mubr.bf16.gmra.mrb[0].mxu0 %v721
    %v806 = vpop.f32.mrb[0].mxu0
    %v807 = vadd.f32 0.0, %v806
    %v808 = vpop.f32.mrb[0].mxu0
    %v809 = vpop.f32.mrb[0].mxu0
    %v810 = vadd.f32 0.0, %v809
    %v811 = vpop.f32.mrb[0].mxu0
    %812 = vmatprep.mubr.bf16.mxu0 0
    %813 = vmatmul.mubr.bf16.gmra.mrb[0].mxu0 %v722
    %v814 = vpop.f32.mrb[0].mxu0
    %v815 = vadd.f32 0.0, %v814
    %v816 = vpop.f32.mrb[0].mxu0
    %v817 = vpop.f32.mrb[0].mxu0
    %v818 = vadd.f32 0.0, %v817
    %v819 = vpop.f32.mrb[0].mxu0
    %820 = vmatprep.mubr.bf16.mxu0 0
    %821 = vmatmul.mubr.bf16.gmra.mrb[0].mxu0 %v723
    %v822 = vpop.f32.mrb[0].mxu0
    %v823 = vadd.f32 0.0, %v822
    %v824 = vpop.f32.mrb[0].mxu0
    %v825 = vpop.f32.mrb[0].mxu0
    %v826 = vadd.f32 0.0, %v825
    %v827 = vpop.f32.mrb[0].mxu0
    %828 = vdwg.mxu0
    %v829 = vmul.f32 %v767, 0.2
    %v830 = vmul.f32 %v770, 0.2
    %v831 = vmul.f32 %v775, 0.2
    %v832 = vmul.f32 %v778, 0.2
    %v833 = vmul.f32 %v783, 0.2
    %v834 = vmul.f32 %v786, 0.2
    %v835 = vmul.f32 %v791, 0.2
    %v836 = vmul.f32 %v794, 0.2
    %v837 = vmul.f32 %v799, 0.2
    %v838 = vmul.f32 %v802, 0.2
    %v839 = vmul.f32 %v807, 0.2
    %v840 = vmul.f32 %v810, 0.2
    %v841 = vmul.f32 %v815, 0.2
    %v842 = vmul.f32 %v818, 0.2
    %v843 = vmul.f32 %v823, 0.2
    %v844 = vmul.f32 %v826, 0.2
    %v845 = vmax.f32 %v767, %v829
    %v846 = vmax.f32 %v770, %v830
    %v847 = vmax.f32 %v775, %v831
    %v848 = vmax.f32 %v778, %v832
    %v849 = vmax.f32 %v783, %v833
    %v850 = vmax.f32 %v786, %v834
    %v851 = vmax.f32 %v791, %v835
    %v852 = vmax.f32 %v794, %v836
    %v853 = vmax.f32 %v799, %v837
    %v854 = vmax.f32 %v802, %v838
    %v855 = vmax.f32 %v807, %v839
    %v856 = vmax.f32 %v810, %v840
    %v857 = vmax.f32 %v815, %v841
    %v858 = vmax.f32 %v818, %v842
    %v859 = vmax.f32 %v823, %v843
    %v860 = vmax.f32 %v826, %v844
    %v861 = vld [vmem:[%s4] sm:$0xf]
    %v862 = vld [vmem:[%s4 + $0x4] sm:$0xf]
    %v863 = vld [vmem:[%s4 + $0x8] sm:$0xf]
    %v864 = vld [vmem:[%s4 + $0xc] sm:$0xf]
    %v865 = vld [vmem:[%s4 + $0x10] sm:$0xf]
    %v866 = vld [vmem:[%s4 + $0x14] sm:$0xf]
    %v867 = vld [vmem:[%s4 + $0x18] sm:$0xf]
    %v868 = vld [vmem:[%s4 + $0x1c] sm:$0xf]
    %v869 = vld [vmem:[%s4 + $0x20] sm:$0xf]
    %v870 = vld [vmem:[%s4 + $0x24] sm:$0xf]
    %v871 = vld [vmem:[%s4 + $0x28] sm:$0xf]
    %v872 = vld [vmem:[%s4 + $0x2c] sm:$0xf]
    %v873 = vld [vmem:[%s4 + $0x30] sm:$0xf]
    %v874 = vld [vmem:[%s4 + $0x34] sm:$0xf]
    %v875 = vld [vmem:[%s4 + $0x38] sm:$0xf]
    %v876 = vld [vmem:[%s4 + $0x3c] sm:$0xf]
    %v877 = vpack.c.bf16 %v846, %v845
    %v878 = vpack.c.bf16 %v848, %v847
    %v879 = vpack.c.bf16 %v850, %v849
    %v880 = vpack.c.bf16 %v852, %v851
    %v881 = vpack.c.bf16 %v854, %v853
    %v882 = vpack.c.bf16 %v856, %v855
    %v883 = vpack.c.bf16 %v858, %v857
    %v884 = vpack.c.bf16 %v860, %v859
    %v901 = vunpack.c.l.b16 %v861
    %v902 = vunpack.c.l.b16 %v862
    %v903 = vunpack.c.l.b16 %v863
    %v904 = vunpack.c.l.b16 %v864
    %v905 = vunpack.c.l.b16 %v865
    %v906 = vunpack.c.l.b16 %v866
    %v907 = vunpack.c.l.b16 %v867
    %v908 = vunpack.c.l.b16 %v868
    %v909 = vunpack.c.l.b16 %v869
    %v910 = vunpack.c.l.b16 %v870
    %v911 = vunpack.c.l.b16 %v871
    %v912 = vunpack.c.l.b16 %v872
    %v913 = vunpack.c.l.b16 %v873
    %v914 = vunpack.c.l.b16 %v874
    %v915 = vunpack.c.l.b16 %v875
    %v916 = vunpack.c.l.b16 %v876
    %v917 = vpack.c.b16 %v902, %v901
    %v918 = vpack.c.b16 %v904, %v903
    %v919 = vpack.c.b16 %v906, %v905
    %v920 = vpack.c.b16 %v908, %v907
    %v921 = vpack.c.b16 %v910, %v909
    %v922 = vpack.c.b16 %v912, %v911
    %v923 = vpack.c.b16 %v914, %v913
    %v924 = vpack.c.b16 %v916, %v915
    %933 = vmatprep.subr.bf16.mxu0 0
    %934 = vmatpush1.bf16.msra.mxu0 %v877
    %935 = vmatprep.subr.bf16.mxu0 0
    %936 = vmatpush1.bf16.msra.mxu0 %v878
    %937 = vmatprep.subr.bf16.mxu0 0
    %938 = vmatpush1.bf16.msra.mxu0 %v879
    %939 = vmatprep.subr.bf16.mxu0 0
    %940 = vmatpush1.bf16.msra.mxu0 %v880
    %941 = vmatprep.subr.bf16.mxu0 0
    %942 = vmatpush1.bf16.msra.mxu0 %v881
    %943 = vmatprep.subr.bf16.mxu0 0
    %944 = vmatpush1.bf16.msra.mxu0 %v882
    %945 = vmatprep.subr.bf16.mxu0 0
    %946 = vmatpush1.bf16.msra.mxu0 %v883
    %947 = vmatprep.subr.bf16.mxu0 0
    %948 = vmatpush1.bf16.msra.mxu0 %v884
    %949 = vmatprep.subr.bf16.mxu0 0
    %950 = vmatpush1.bf16.msra.mxu0 0
    %951 = vmatprep.subr.bf16.mxu0 0
    %952 = vmatpush1.bf16.msra.mxu0 0
    %953 = vmatprep.subr.bf16.mxu0 0
    %954 = vmatpush1.bf16.msra.mxu0 0
    %955 = vmatprep.subr.bf16.mxu0 0
    %956 = vmatpush1.bf16.msra.mxu0 0
    %957 = vmatprep.subr.bf16.mxu0 0
    %958 = vmatpush1.bf16.msra.mxu0 0
    %959 = vmatprep.subr.bf16.mxu0 0
    %960 = vmatpush1.bf16.msra.mxu0 0
    %961 = vmatprep.subr.bf16.mxu0 0
    %962 = vmatpush1.bf16.msra.mxu0 0
    %963 = vmatprep.subr.bf16.mxu0 0
    %964 = vmatpush1.bf16.msra.mxu0 0
    %965 = vmatprep.mubr.bf16.mxu0 0
    %966 = vmatmul.mubr.bf16.gmra.mrb[0].mxu0 %v917
    %v967 = vpop.f32.mrb[0].mxu0
    %v968 = vadd.f32 0.0, %v967
    %v969 = vpop.f32.mrb[0].mxu0
    %v970 = vpop.f32.mrb[0].mxu0
    %v971 = vadd.f32 0.0, %v970
    %v972 = vpop.f32.mrb[0].mxu0
    %973 = vmatprep.mubr.bf16.mxu0 0
    %974 = vmatmul.mubr.bf16.gmra.mrb[0].mxu0 %v918
    %v975 = vpop.f32.mrb[0].mxu0
    %v976 = vadd.f32 0.0, %v975
    %v977 = vpop.f32.mrb[0].mxu0
    %v978 = vpop.f32.mrb[0].mxu0
    %v979 = vadd.f32 0.0, %v978
    %v980 = vpop.f32.mrb[0].mxu0
    %981 = vmatprep.mubr.bf16.mxu0 0
    %982 = vmatmul.mubr.bf16.gmra.mrb[0].mxu0 %v919
    %v983 = vpop.f32.mrb[0].mxu0
    %v984 = vadd.f32 0.0, %v983
    %v985 = vpop.f32.mrb[0].mxu0
    %v986 = vpop.f32.mrb[0].mxu0
    %v987 = vadd.f32 0.0, %v986
    %v988 = vpop.f32.mrb[0].mxu0
    %989 = vmatprep.mubr.bf16.mxu0 0
    %990 = vmatmul.mubr.bf16.gmra.mrb[0].mxu0 %v920
    %v991 = vpop.f32.mrb[0].mxu0
    %v992 = vadd.f32 0.0, %v991
    %v993 = vpop.f32.mrb[0].mxu0
    %v994 = vpop.f32.mrb[0].mxu0
    %v995 = vadd.f32 0.0, %v994
    %v996 = vpop.f32.mrb[0].mxu0
    %997 = vmatprep.mubr.bf16.mxu0 0
    %998 = vmatmul.mubr.bf16.gmra.mrb[0].mxu0 %v921
    %v999 = vpop.f32.mrb[0].mxu0
    %v1000 = vadd.f32 0.0, %v999
    %v1001 = vpop.f32.mrb[0].mxu0
    %v1002 = vpop.f32.mrb[0].mxu0
    %v1003 = vadd.f32 0.0, %v1002
    %v1004 = vpop.f32.mrb[0].mxu0
    %1005 = vmatprep.mubr.bf16.mxu0 0
    %1006 = vmatmul.mubr.bf16.gmra.mrb[0].mxu0 %v922
    %v1007 = vpop.f32.mrb[0].mxu0
    %v1008 = vadd.f32 0.0, %v1007
    %v1009 = vpop.f32.mrb[0].mxu0
    %v1010 = vpop.f32.mrb[0].mxu0
    %v1011 = vadd.f32 0.0, %v1010
    %v1012 = vpop.f32.mrb[0].mxu0
    %1013 = vmatprep.mubr.bf16.mxu0 0
    %1014 = vmatmul.mubr.bf16.gmra.mrb[0].mxu0 %v923
    %v1015 = vpop.f32.mrb[0].mxu0
    %v1016 = vadd.f32 0.0, %v1015
    %v1017 = vpop.f32.mrb[0].mxu0
    %v1018 = vpop.f32.mrb[0].mxu0
    %v1019 = vadd.f32 0.0, %v1018
    %v1020 = vpop.f32.mrb[0].mxu0
    %1021 = vmatprep.mubr.bf16.mxu0 0
    %1022 = vmatmul.mubr.bf16.gmra.mrb[0].mxu0 %v924
    %v1023 = vpop.f32.mrb[0].mxu0
    %v1024 = vadd.f32 0.0, %v1023
    %v1025 = vpop.f32.mrb[0].mxu0
    %v1026 = vpop.f32.mrb[0].mxu0
    %v1027 = vadd.f32 0.0, %v1026
    %v1028 = vpop.f32.mrb[0].mxu0
    %1029 = vdwg.mxu0
    %v1030 = vmul.f32 %v968, 0.2
    %v1031 = vmul.f32 %v971, 0.2
    %v1032 = vmul.f32 %v976, 0.2
    %v1033 = vmul.f32 %v979, 0.2
    %v1034 = vmul.f32 %v984, 0.2
    %v1035 = vmul.f32 %v987, 0.2
    %v1036 = vmul.f32 %v992, 0.2
    %v1037 = vmul.f32 %v995, 0.2
    %v1038 = vmul.f32 %v1000, 0.2
    %v1039 = vmul.f32 %v1003, 0.2
    %v1040 = vmul.f32 %v1008, 0.2
    %v1041 = vmul.f32 %v1011, 0.2
    %v1042 = vmul.f32 %v1016, 0.2
    %v1043 = vmul.f32 %v1019, 0.2
    %v1044 = vmul.f32 %v1024, 0.2
    %v1045 = vmul.f32 %v1027, 0.2
    %v1046 = vmax.f32 %v968, %v1030
    %v1047 = vmax.f32 %v971, %v1031
    %v1048 = vmax.f32 %v976, %v1032
    %v1049 = vmax.f32 %v979, %v1033
    %v1050 = vmax.f32 %v984, %v1034
    %v1051 = vmax.f32 %v987, %v1035
    %v1052 = vmax.f32 %v992, %v1036
    %v1053 = vmax.f32 %v995, %v1037
    %v1054 = vmax.f32 %v1000, %v1038
    %v1055 = vmax.f32 %v1003, %v1039
    %v1056 = vmax.f32 %v1008, %v1040
    %v1057 = vmax.f32 %v1011, %v1041
    %v1058 = vmax.f32 %v1016, %v1042
    %v1059 = vmax.f32 %v1019, %v1043
    %v1060 = vmax.f32 %v1024, %v1044
    %v1061 = vmax.f32 %v1027, %v1045
    %v1062 = vld [vmem:[%s5] sm:$0xff]
    %v1063 = vld [vmem:[%s5 + $0x8] sm:$0xff]
    %v1064 = vld [vmem:[%s5 + $0x10] sm:$0xff]
    %v1065 = vld [vmem:[%s5 + $0x18] sm:$0xff]
    %v1066 = vld [vmem:[%s5 + $0x20] sm:$0xff]
    %v1067 = vld [vmem:[%s5 + $0x28] sm:$0xff]
    %v1068 = vld [vmem:[%s5 + $0x30] sm:$0xff]
    %v1069 = vld [vmem:[%s5 + $0x38] sm:$0xff]
    %v1070 = vld [vmem:[%s5 + $0x40] sm:$0xff]
    %v1071 = vld [vmem:[%s5 + $0x48] sm:$0xff]
    %v1072 = vld [vmem:[%s5 + $0x50] sm:$0xff]
    %v1073 = vld [vmem:[%s5 + $0x58] sm:$0xff]
    %v1074 = vld [vmem:[%s5 + $0x60] sm:$0xff]
    %v1075 = vld [vmem:[%s5 + $0x68] sm:$0xff]
    %v1076 = vld [vmem:[%s5 + $0x70] sm:$0xff]
    %v1077 = vld [vmem:[%s5 + $0x78] sm:$0xff]
    %1079 = vset.pattern.permute.xlu0 0
    %1080 = vperm.xlu0 %1079, %v1062
    %v1081 = vpop.permute.xlu0 %1080
    %1084 = vset.pattern.permute.xlu0 0
    %1085 = vperm.xlu0 %1084, %v1063
    %v1086 = vpop.permute.xlu0 %1085
    %1089 = vset.pattern.permute.xlu0 0
    %1090 = vperm.xlu0 %1089, %v1064
    %v1091 = vpop.permute.xlu0 %1090
    %1094 = vset.pattern.permute.xlu0 0
    %1095 = vperm.xlu0 %1094, %v1065
    %v1096 = vpop.permute.xlu0 %1095
    %1099 = vset.pattern.permute.xlu0 0
    %1100 = vperm.xlu0 %1099, %v1066
    %v1101 = vpop.permute.xlu0 %1100
    %1104 = vset.pattern.permute.xlu0 0
    %1105 = vperm.xlu0 %1104, %v1067
    %v1106 = vpop.permute.xlu0 %1105
    %1109 = vset.pattern.permute.xlu0 0
    %1110 = vperm.xlu0 %1109, %v1068
    %v1111 = vpop.permute.xlu0 %1110
    %1114 = vset.pattern.permute.xlu0 0
    %1115 = vperm.xlu0 %1114, %v1069
    %v1116 = vpop.permute.xlu0 %1115
    %1119 = vset.pattern.permute.xlu0 0
    %1120 = vperm.xlu0 %1119, %v1070
    %v1121 = vpop.permute.xlu0 %1120
    %1124 = vset.pattern.permute.xlu0 0
    %1125 = vperm.xlu0 %1124, %v1071
    %v1126 = vpop.permute.xlu0 %1125
    %1129 = vset.pattern.permute.xlu0 0
    %1130 = vperm.xlu0 %1129, %v1072
    %v1131 = vpop.permute.xlu0 %1130
    %1134 = vset.pattern.permute.xlu0 0
    %1135 = vperm.xlu0 %1134, %v1073
    %v1136 = vpop.permute.xlu0 %1135
    %1139 = vset.pattern.permute.xlu0 0
    %1140 = vperm.xlu0 %1139, %v1074
    %v1141 = vpop.permute.xlu0 %1140
    %1144 = vset.pattern.permute.xlu0 0
    %1145 = vperm.xlu0 %1144, %v1075
    %v1146 = vpop.permute.xlu0 %1145
    %1149 = vset.pattern.permute.xlu0 0
    %1150 = vperm.xlu0 %1149, %v1076
    %v1151 = vpop.permute.xlu0 %1150
    %1154 = vset.pattern.permute.xlu0 0
    %1155 = vperm.xlu0 %1154, %v1077
    %v1156 = vpop.permute.xlu0 %1155
    %v1158 = vmul.f32 %v1046, %v1081
    %v1159 = vmul.f32 %v1047, %v1086
    %v1160 = vmul.f32 %v1048, %v1091
    %v1161 = vmul.f32 %v1049, %v1096
    %v1162 = vmul.f32 %v1050, %v1101
    %v1163 = vmul.f32 %v1051, %v1106
    %v1164 = vmul.f32 %v1052, %v1111
    %v1165 = vmul.f32 %v1053, %v1116
    %v1166 = vmul.f32 %v1054, %v1121
    %v1167 = vmul.f32 %v1055, %v1126
    %v1168 = vmul.f32 %v1056, %v1131
    %v1169 = vmul.f32 %v1057, %v1136
    %v1170 = vmul.f32 %v1058, %v1141
    %v1171 = vmul.f32 %v1059, %v1146
    %v1172 = vmul.f32 %v1060, %v1151
    %v1173 = vmul.f32 %v1061, %v1156
    %v1174 = vadd.f32 %v1158, %v1159
    %v1175 = vadd.f32 %v1174, %v1160
    %v1176 = vadd.f32 %v1175, %v1161
    %v1177 = vadd.f32 %v1176, %v1162
    %v1178 = vadd.f32 %v1177, %v1163
    %v1179 = vadd.f32 %v1178, %v1164
    %v1180 = vadd.f32 %v1179, %v1165
    %v1181 = vadd.f32 %v1180, %v1166
    %v1182 = vadd.f32 %v1181, %v1167
    %v1183 = vadd.f32 %v1182, %v1168
    %v1184 = vadd.f32 %v1183, %v1169
    %v1185 = vadd.f32 %v1184, %v1170
    %v1186 = vadd.f32 %v1185, %v1171
    %v1187 = vadd.f32 %v1186, %v1172
    %v1188 = vadd.f32 %v1187, %v1173
    %v1189 = vrot.slane %v1188, 4
    %v1190 = vadd.f32 %v1188, %v1189
    %v1191 = vrot.slane %v1190, 2
    %v1192 = vadd.f32 %v1190, %v1191
    %v1193 = vrot.slane %v1192, 1
    %v1194 = vadd.f32 %v1192, %v1193
    %1195 = vst [vmem:[#allocation2] sm:$0x1] %v1194
    // Predicated region
    $region26: #{tpu_custom_call.1} parent=1 // pred_check
      _
    $region27: #{tpu_custom_call.1} parent=1 // pred_check_branch
      %1197 = sbr.rel (0) target = $region29
    $region28: #{tpu_custom_call.1} parent=1 // pred_region
      %s1199 = ssub.s32 16, 16
      %1200 = vsyncadd [#allocation3], %s1199
      %s1202 = sshll.u32 [#allocation2], 4
      %s1203 = int_to_ptr.vmem [resolvable:$true] %s1202
      %1205 = dma.vmem_to_hbm [thread:$0]  %s1203, 16, %s6, [#allocation3]
    $region29: #{tpu_custom_call.1} parent=1 // pred_fallthru
      _
    // Predicated region
    $region30: #{tpu_custom_call.1} parent=1 // pred_check
      _
    $region31: #{tpu_custom_call.1} parent=1 // pred_check_branch
      %1207 = sbr.rel (0) target = $region33
    $region32: #{tpu_custom_call.1} parent=1 // pred_region
      %1208 = dma.done [#allocation3], 16
    $region33: #{tpu_custom_call.1} parent=1 // pred_fallthru
      _
    %1209 = vsyncpa [#allocation3], 1

</llo_original>
